<compile_context>
chip_gen: v7x
topology: tpu7x:2x2x1
jax: 0.10.0
libtpu: 0.0.40
codegen_flags: <defaults>
</compile_context>

<pallas_src>
import math

import jax
import jax.numpy as jnp
from jax.experimental import pallas as pl
from jax.experimental.pallas import tpu as pltpu

_SMALL_BYTES = 1 << 20         # <= 1 MiB total -> single lane-dense block
_TARGET_TILE_BYTES = 4 << 20   # ~4 MiB streamed blocks (good on v6e, much better on v7x)
_VMEM_CAP = 48 << 20           # never request full physical VMEM (v7x has only 64 MiB)


def make_positional_encoding(d_model: int, max_len: int = 5000) -> jnp.ndarray:
    """Builds pe of shape (1, max_len, d_model), matching the PyTorch __init__."""
    position = jnp.arange(0, max_len, dtype=jnp.float32)[:, None]            # (max_len, 1)
    div_term = jnp.exp(
        jnp.arange(0, d_model, 2, dtype=jnp.float32) * (-math.log(10000.0) / d_model)
    )                                                                         # (d_model//2,)
    pe = jnp.zeros((max_len, d_model), dtype=jnp.float32)
    pe = pe.at[:, 0::2].set(jnp.sin(position * div_term))
    pe = pe.at[:, 1::2].set(jnp.cos(position * div_term))
    return pe[None, :, :]                                                     # (1, max_len, d_model)


def _pe_add_kernel(x_ref, pe_ref, o_ref):
    # Broadcasted elementwise add; works for every layout used below:
    #   (B, S*D)+(1, S*D) | (tb, S*D)+(1, S*D) | (1, ts, D')+(1, ts, D')
    o_ref[...] = x_ref[...] + pe_ref[...]


def _sublane(itemsize: int) -> int:
    """Minimum sublane multiple for the packed dtype (f32->8, bf16->16, int8/fp8->32)."""
    return {4: 8, 2: 16, 1: 32}.get(int(itemsize), 8)


def _choose_seq_tile(S: int, row_bytes: int, sub: int, requested=None) -> int:
    """Sequence-tile length giving ~_TARGET_TILE_BYTES blocks, sublane aligned."""
    if requested is None:
        ts = max(sub, _TARGET_TILE_BYTES // max(1, row_bytes))
    else:
        ts = max(1, int(requested))
    ts = min(ts, S)
    if ts < S:
        ts = max(sub, (ts // sub) * sub)
        if ts > S:           # S smaller than one packed sublane group: take it whole
            ts = S
    return int(ts)


def positional_encoding_forward(x: jnp.ndarray, pe: jnp.ndarray,
                                *, seq_tile=None, donate_x: bool = False) -> jnp.ndarray:
    """x: (B, S, D); pe: (1, max_len, D) with max_len >= S.  Returns x + pe[:, :S, :]."""
    B, S, D = x.shape
    assert pe.ndim == 3 and pe.shape[0] == 1 and pe.shape[2] == D, "pe must be (1, max_len, D)"
    max_len = pe.shape[1]
    assert max_len >= S, f"pe max_len ({max_len}) must be >= sequence length ({S})"

    pe = pe.astype(x.dtype)
    itemsize = x.dtype.itemsize
    sub = _sublane(itemsize)
    nbytes = B * S * D * itemsize
    row_bytes = S * D * itemsize          # bytes of one full-sequence slab (per batch row)

    # ---------------- Path A: tiny inputs -> one lane-dense block, one grid step ----------------
    if seq_tile is None and nbytes <= _SMALL_BYTES:
        x2d = x.reshape(B, S * D)
        pe2d = (pe[:, :S, :] if S < max_len else pe).reshape(1, S * D)
        out2d = pl.pallas_call(
            _pe_add_kernel,
            out_shape=jax.ShapeDtypeStruct((B, S * D), x.dtype),
            grid=(1,),
            in_specs=[
                pl.BlockSpec((B, S * D), lambda i: (0, 0)),
                pl.BlockSpec((1, S * D), lambda i: (0, 0)),
            ],
            out_specs=pl.BlockSpec((B, S * D), lambda i: (0, 0)),
            compiler_params=pltpu.CompilerParams(dimension_semantics=("arbitrary",)),
        )(x2d, pe2d)
        return out2d.reshape(B, S, D)

    # ------------- Path B: short sequences -> flatten and tile over BATCH (lane-dense) -------------
    if seq_tile is None and row_bytes <= _TARGET_TILE_BYTES:
        x2d = x.reshape(B, S * D)
        pe2d = (pe[:, :S, :] if S < max_len else pe).reshape(1, S * D)
        tb = max(sub, _TARGET_TILE_BYTES // max(1, row_bytes))
        tb = (tb // sub) * sub
        tb = min(tb, B)
        if tb >= B or tb < sub:
            tb = B                                          # full batch in one block is always legal
        n_batch_tiles = pl.cdiv(B, tb)
        block_bytes = tb * row_bytes
        vmem_limit = int(min(_VMEM_CAP, max(32 << 20, 8 * block_bytes)))
        out2d = pl.pallas_call(
            _pe_add_kernel,
            out_shape=jax.ShapeDtypeStruct((B, S * D), x.dtype),
            grid=(n_batch_tiles,),
            in_specs=[
                pl.BlockSpec((tb, S * D), lambda i: (i, 0)),     # x batch tile
                pl.BlockSpec((1, S * D), lambda i: (0, 0)),      # pe slab, reused every step
            ],
            out_specs=pl.BlockSpec((tb, S * D), lambda i: (i, 0)),
            compiler_params=pltpu.CompilerParams(
                dimension_semantics=("parallel",),
                vmem_limit_bytes=vmem_limit,
            ),
            input_output_aliases=({0: 0} if donate_x else {}),
        )(x2d, pe2d)
        return out2d.reshape(B, S, D)

    # ---------------- Path C: streaming ~4 MiB sequence tiles over a 2-D grid ----------------
    # Lane-density fold: when D is not a multiple of 128, fold r rows into the lane dim so
    # stores are unmasked.  pe's full buffer is reshaped for free (no slice copy) because we
    # require max_len % r == 0; windowing still happens via the BlockSpec index_map.
    r = 1
    if D % 128 != 0:
        r_cand = 128 // math.gcd(D, 128)
        if S % r_cand == 0 and max_len % r_cand == 0:
            r = r_cand
    if r > 1:
        xw = x.reshape(B, S // r, D * r)
        pew = pe.reshape(1, max_len // r, D * r)
    else:
        xw, pew = x, pe
    Sw, Dw = xw.shape[1], xw.shape[2]

    req = None if seq_tile is None else max(1, int(seq_tile) // r)
    ts = _choose_seq_tile(Sw, Dw * itemsize, sub, requested=req)

    # Rare edge case: a full-S tile that is not sublane aligned would make pe's block dim
    # neither aligned nor equal to pe's full seq dim -> pre-slice pe so it is the full dim.
    if ts == Sw and (Sw % sub != 0) and (Sw != pew.shape[1]):
        pew = pew[:, :Sw, :]

    num_seq_tiles = pl.cdiv(Sw, ts)
    block_bytes = ts * Dw * itemsize
    vmem_limit = int(min(_VMEM_CAP, max(32 << 20, 8 * block_bytes)))

    # Put the axis with more steps OUTERMOST and mark it "parallel" so both of v7x's
    # TensorCores get work; the inner axis stays "arbitrary" (sequential), which also
    # guarantees pe-tile reuse across batch steps when batch is the inner axis.
    if num_seq_tiles >= B:
        grid = (num_seq_tiles, B)
        x_spec = pl.BlockSpec((1, ts, Dw), lambda s, b: (b, s, 0))
        pe_spec = pl.BlockSpec((1, ts, Dw), lambda s, b: (0, s, 0))   # constant across inner b
        o_spec = pl.BlockSpec((1, ts, Dw), lambda s, b: (b, s, 0))
    else:
        grid = (B, num_seq_tiles)
        x_spec = pl.BlockSpec((1, ts, Dw), lambda b, s: (b, s, 0))
        pe_spec = pl.BlockSpec((1, ts, Dw), lambda b, s: (0, s, 0))
        o_spec = pl.BlockSpec((1, ts, Dw), lambda b, s: (b, s, 0))

    out = pl.pallas_call(
        _pe_add_kernel,
        out_shape=jax.ShapeDtypeStruct((B, Sw, Dw), x.dtype),
        grid=grid,
        in_specs=[x_spec, pe_spec],
        out_specs=o_spec,
        compiler_params=pltpu.CompilerParams(
            dimension_semantics=("parallel", "arbitrary"),
            vmem_limit_bytes=vmem_limit,
        ),
        input_output_aliases=({0: 0} if donate_x else {}),
    )(xw, pew)
    return out.reshape(B, S, D)


if __name__ == "__main__":
    # ---- Test 1: small shapes consistent with the module (Path A, lane-dense flat) ----
    B, S, D, MAX_LEN = 2, 8, 32, 64
    x_small = jax.random.normal(jax.random.PRNGKey(0), (B, S, D), dtype=jnp.float32)
    pe_small = make_positional_encoding(D, max_len=MAX_LEN)
    out_small = jax.block_until_ready(positional_encoding_forward(x_small, pe_small))
    ref_small = x_small + pe_small[:, :S, :]
    assert out_small.shape == (B, S, D)
    assert jnp.allclose(out_small, ref_small, atol=1e-6, rtol=1e-6)

    # ---- Test 2: batch-tiled lane-dense path (Path B) ----
    B2, S2, D2, MAX_LEN2 = 2, 1024, 256, 2048
    x_big = jax.random.normal(jax.random.PRNGKey(0), (B2, S2, D2), dtype=jnp.float32)
    pe_big = make_positional_encoding(D2, max_len=MAX_LEN2)
    ref_big = x_big + pe_big[:, :S2, :]
    out_b = jax.block_until_ready(positional_encoding_forward(x_big, pe_big))
    assert jnp.allclose(out_b, ref_big, atol=1e-6, rtol=1e-6)

    # ---- Test 3: forced streaming path with a tile that does not divide S (masked tail) ----
    out_tail = jax.block_until_ready(
        positional_encoding_forward(x_big, pe_big, seq_tile=384))
    assert jnp.allclose(out_tail, ref_big, atol=1e-6, rtol=1e-6)

    # ---- Test 4: streaming path with lane-density fold (D=64 -> fold 2 rows into lanes) ----
    B4, S4, D4, MAX_LEN4 = 2, 1024, 64, 1024
    x_f = jax.random.normal(jax.random.PRNGKey(0), (B4, S4, D4), dtype=jnp.float32)
    pe_f = make_positional_encoding(D4, max_len=MAX_LEN4)
    ref_f = x_f + pe_f[:, :S4, :]
    out_f = jax.block_until_ready(
        positional_encoding_forward(x_f, pe_f, seq_tile=384))
    assert jnp.allclose(out_f, ref_f, atol=1e-6, rtol=1e-6)

    # ---- Test 5: naturally streaming path (long sequence, ~4 MiB tiles, 2-D grid) ----
    B5, S5, D5, MAX_LEN5 = 2, 4096, 512, 4096
    x_l = jax.random.normal(jax.random.PRNGKey(0), (B5, S5, D5), dtype=jnp.float32)
    pe_l = make_positional_encoding(D5, max_len=MAX_LEN5)
    ref_l = x_l + pe_l[:, :S5, :]
    out_l = jax.block_until_ready(positional_encoding_forward(x_l, pe_l))
    assert jnp.allclose(out_l, ref_l, atol=1e-6, rtol=1e-6)

    print("KERNEL_OK")
</pallas_src>

<mosaic_0001>
module attributes {stable_mosaic.version = 11 : i64} {
  func.func @_pe_add_kernel(%arg0: i32, %arg1: memref<2x256xf32, #tpu.memory_space<vmem>>, %arg2: memref<1x256xf32, #tpu.memory_space<vmem>>, %arg3: memref<2x256xf32, #tpu.memory_space<vmem>>) attributes {dimension_semantics = [#tpu.dimension_semantics<arbitrary>], iteration_bounds = array<i64: 1>, scalar_prefetch = 0 : i64, scratch_operands = 0 : i64, tpu.core_type = #tpu.core_type<tc>, window_params = [{pipeline_mode = #tpu.pipeline_mode<synchronous>, transform_indices = @transform_0, window_bounds = array<i64: 2, 256>}, {pipeline_mode = #tpu.pipeline_mode<synchronous>, transform_indices = @transform_1, window_bounds = array<i64: 1, 256>}, {pipeline_mode = #tpu.pipeline_mode<synchronous>, transform_indices = @transform_2, window_bounds = array<i64: 2, 256>}]} {
    %c0 = arith.constant 0 : index
    %c0_0 = arith.constant 0 : index
    %0 = vector.load %arg1[%c0, %c0_0] : memref<2x256xf32, #tpu.memory_space<vmem>>, vector<2x256xf32>
    %c0_1 = arith.constant 0 : index
    %c0_2 = arith.constant 0 : index
    %1 = vector.load %arg2[%c0_1, %c0_2] : memref<1x256xf32, #tpu.memory_space<vmem>>, vector<1x256xf32>
    %2 = vector.broadcast %1 : vector<1x256xf32> to vector<2x256xf32>
    %3 = arith.addf %0, %2 : vector<2x256xf32>
    %c0_3 = arith.constant 0 : index
    %c0_4 = arith.constant 0 : index
    %4 = vector.load %arg3[%c0_3, %c0_4] : memref<2x256xf32, #tpu.memory_space<vmem>>, vector<2x256xf32>
    tpu.vector_store %arg3[%c0_3, %c0_4], %3 {strides = array<i32>} : memref<2x256xf32, #tpu.memory_space<vmem>>, vector<2x256xf32>,
    return
  }
  func.func @transform_0(%arg0: i32) -> (i32, i32) {
    %c0_i32 = arith.constant 0 : i32
    %c0_i32_0 = arith.constant 0 : i32
    %c0_i32_1 = arith.constant 0 : i32
    return %c0_i32, %c0_i32_0 : i32, i32
  }
  func.func @transform_1(%arg0: i32) -> (i32, i32) {
    %c0_i32 = arith.constant 0 : i32
    %c0_i32_0 = arith.constant 0 : i32
    %c0_i32_1 = arith.constant 0 : i32
    return %c0_i32, %c0_i32_0 : i32, i32
  }
  func.func @transform_2(%arg0: i32) -> (i32, i32) {
    %c0_i32 = arith.constant 0 : i32
    %c0_i32_0 = arith.constant 0 : i32
    %c0_i32_1 = arith.constant 0 : i32
    return %c0_i32, %c0_i32_0 : i32, i32
  }
}

</mosaic_0001>

<llo_original>
// kernel: tpu_custom_call.1
$region0: #{tpu_custom_call.1}
  #allocation0 [shape = 'u32[]', space=smem, size = 0x4, offset = 0x4, fixed_abs, tag = 'smem constant byte address 0x4 - core index']
  #allocation1 [shape = 'u32[144,128]{1,0:T(1,128)}', space=vmem, size = 0x12000, scoped, tag = 'internal scratch']
  %s0 = inlined_call_operand.hbm [shape: f32[2,256], index: 0, kind: input, shape index: {}]
  %s1 = inlined_call_operand.vmem [shape: f32[1,256], index: 1, kind: input, shape index: {}]
  %s2 = inlined_call_operand.hbm [shape: f32[2,256], index: 2, kind: output, shape index: {}]
  %s3 = sld [smem:[#allocation0]]
  $region22: #{tpu_custom_call.1} parent=0
    _
  %s5 = ssub.s32 1, %s3
  %s6 = scalar_select 0, %s5, %s3
  $region1: #{tpu_custom_call.1} parent=0
    #allocation2 [shape = 'u8[2048]{0}', space=vmem, size = 0x800, scoped, tag = 'input window, operand 0, single buffered']
    #allocation3 [shape = 's32[1]{0}', space=sflag, size = 0x4, scoped, tag = 'scoped memory for tpu_custom_call.1']
    #allocation4 [shape = 's32[1]{0}', space=sflag, size = 0x4, scoped, tag = 'scoped memory for tpu_custom_call.1']
    #allocation5 [shape = 'u8[2048]{0}', space=vmem, size = 0x800, scoped, tag = 'output window, operand 0, single buffered']
    %7 = vsyncpa [#allocation3], 0
    %8 = vsyncpa [#allocation4], 0
    // Predicated region
    $region2: #{tpu_custom_call.1} parent=1 // pred_check
      _
    $region3: #{tpu_custom_call.1} parent=1 // pred_check_branch
      %10 = sbr.rel (0) target = $region5
    $region4: #{tpu_custom_call.1} parent=1 // pred_region
      %s12 = ssub.s32 64, 64
      %13 = vsyncadd [#allocation3], %s12
      %s15 = sshll.u32 [#allocation2], 4
      %s16 = int_to_ptr.vmem [resolvable:$true] %s15
      %18 = dma.hbm_to_vmem [thread:$0]  %s0, 64, %s16, [#allocation3]
    $region5: #{tpu_custom_call.1} parent=1 // pred_fallthru
      _
    // Predicated region
    $region6: #{tpu_custom_call.1} parent=1 // pred_check
      _
    $region7: #{tpu_custom_call.1} parent=1 // pred_check_branch
      %20 = sbr.rel (0) target = $region9
    $region8: #{tpu_custom_call.1} parent=1 // pred_region
      _
    $region9: #{tpu_custom_call.1} parent=1 // pred_fallthru
      _
    // Predicated region
    $region10: #{tpu_custom_call.1} parent=1 // pred_check
      _
    $region11: #{tpu_custom_call.1} parent=1 // pred_check_branch
      %22 = sbr.rel (0) target = $region13
    $region12: #{tpu_custom_call.1} parent=1 // pred_region
      %23 = dma.done [#allocation3], 64
    $region13: #{tpu_custom_call.1} parent=1 // pred_fallthru
      _
    %v24 = vld [vmem:[#allocation2] sm:$0xf]
    %v25 = vld [vmem:[%s1] sm:$0x3]
    %v27 = vlaneseq
    %v28 = vshrl.u32 %v27, 7
    %v29 = vsub.s32 0, %v28
    %v30 = vrot.slane %v25, %v29
    %v31 = vlaneseq
    %v32 = vshrl.u32 %v31, 7
    %v33 = vsub.s32 1, %v32
    %v34 = vrot.slane %v25, %v33
    %v35 = vcombine.low %v30, %v34
    %v37 = vunpack.c.l.s4 1983009808
    %v38 = vunpack.c.0.s8 %v37
    %v39 = vlaneseq
    %v40 = vshrl.u32 %v39, 7
    %v41 = vsub.s32 %v38, %v40
    %v42 = vrot.slane %v35, %v41
    %v44 = vadd.f32 %v24, %v42
    %45 = vst [vmem:[#allocation5] sm:$0xf] %v44
    // Predicated region
    $region14: #{tpu_custom_call.1} parent=1 // pred_check
      _
    $region15: #{tpu_custom_call.1} parent=1 // pred_check_branch
      %47 = sbr.rel (0) target = $region17
    $region16: #{tpu_custom_call.1} parent=1 // pred_region
      %s49 = ssub.s32 64, 64
      %50 = vsyncadd [#allocation4], %s49
      %s52 = sshll.u32 [#allocation5], 4
      %s53 = int_to_ptr.vmem [resolvable:$true] %s52
      %55 = dma.vmem_to_hbm [thread:$0]  %s53, 64, %s2, [#allocation4]
    $region17: #{tpu_custom_call.1} parent=1 // pred_fallthru
      _
    // Predicated region
    $region18: #{tpu_custom_call.1} parent=1 // pred_check
      _
    $region19: #{tpu_custom_call.1} parent=1 // pred_check_branch
      %57 = sbr.rel (0) target = $region21
    $region20: #{tpu_custom_call.1} parent=1 // pred_region
      %58 = dma.done [#allocation4], 64
    $region21: #{tpu_custom_call.1} parent=1 // pred_fallthru
      _
    %59 = vsyncpa [#allocation3], 1
    %60 = vsyncpa [#allocation4], 1

</llo_original>
